<compile_context>
chip_gen: v7x
topology: tpu7x:2x2x1
jax: 0.10.0
libtpu: 0.0.40
codegen_flags: <defaults>
</compile_context>

<pallas_src>
import math
import jax
import jax.numpy as jnp
from jax.experimental import pallas as pl
from jax.experimental.pallas import tpu as pltpu


def _round_up(x, m):
    return ((x + m - 1) // m) * m


# ----------------------------------------------------------------------------
# Pallas kernel: out = relu(patches @ weight + bias), f32 accumulate.
# ----------------------------------------------------------------------------
def _gemm_bias_relu_kernel(p_ref, w_ref, b_ref, o_ref):
    acc = jnp.dot(p_ref[...], w_ref[...], preferred_element_type=jnp.float32)
    acc = acc + b_ref[...]                       # (1, OCp) f32 bias broadcast
    o_ref[...] = jnp.maximum(acc, 0.0).astype(o_ref.dtype)


def gemm_bias_relu(patches, weight, bias2d, *, tm=256):
    """patches: (M, K) bf16/f32, weight: (K, OCp) bf16/f32, bias2d: (1, OCp) f32.

    Returns relu(patches @ weight + bias) as (M, OCp) float32.
    OCp and K must be multiples of 128 (lane-dense input and output tiles).
    """
    M, K = patches.shape
    Kw, OCp = weight.shape
    assert Kw == K and K % 128 == 0 and OCp % 128 == 0

    # M tile: big enough to pipeline, rounded to the bf16 sublane packing (16).
    tm = min(tm, _round_up(M, 16))
    grid_m = pl.cdiv(M, tm)

    return pl.pallas_call(
        _gemm_bias_relu_kernel,
        out_shape=jax.ShapeDtypeStruct((M, OCp), jnp.float32),
        grid=(grid_m,),
        in_specs=[
            pl.BlockSpec((tm, K), lambda i: (i, 0)),     # patches: tiled over M
            pl.BlockSpec((K, OCp), lambda i: (0, 0)),    # weight: resident
            pl.BlockSpec((1, OCp), lambda i: (0, 0)),    # bias:   resident
        ],
        out_specs=pl.BlockSpec((tm, OCp), lambda i: (i, 0)),
        compiler_params=pltpu.CompilerParams(
            dimension_semantics=("parallel",)),          # shard M across TCs (v7x)
    )(patches, weight, bias2d)


# ----------------------------------------------------------------------------
# im2col glue (plain JAX, NHWC).  Flat patch column index = (i*KW + j)*C + c,
# matching the weight reorder transpose(w, (2,3,1,0)).reshape(KH*KW*C, OC).
# ----------------------------------------------------------------------------
def _im2col_nhwc(x, kh, kw, stride):
    N, H, W, C = x.shape
    OH = (H - kh) // stride + 1
    OW = (W - kw) // stride + 1
    cols = []
    for i in range(kh):
        for j in range(kw):
            cols.append(x[:, i:i + stride * OH:stride, j:j + stride * OW:stride, :])
    p = jnp.stack(cols, axis=3)                    # (N, OH, OW, KH*KW, C)
    p = p.reshape(N * OH * OW, kh * kw * C)        # flat col = (i*kw+j)*C + c
    return p, OH, OW


def conv2d_relu_nhwc(x_nhwc, w, b, stride, *, compute_dtype=jnp.bfloat16, tm=256):
    """x_nhwc: (N,H,W,C); w: (OC,IC,KH,KW) torch layout; b: (OC,).

    Returns relu(conv(x)) in NHWC: (N, OH, OW, OC), float32.
    """
    N, H, W, C = x_nhwc.shape
    OC, IC, KH, KW = w.shape
    assert C == IC

    patches, OH, OW = _im2col_nhwc(x_nhwc.astype(compute_dtype), KH, KW, stride)
    K = patches.shape[1]
    Kp = _round_up(K, 128)
    OCp = _round_up(OC, 128)

    # Weight -> (K, OC) in the same flat order as the patches, then zero-pad
    # K to a lane multiple and OC to 128 (exact; padded columns are sliced off).
    w2d = jnp.transpose(w, (2, 3, 1, 0)).reshape(K, OC)
    w2d = jnp.pad(w2d, ((0, Kp - K), (0, OCp - OC))).astype(compute_dtype)
    if Kp != K:
        patches = jnp.pad(patches, ((0, 0), (0, Kp - K)))
    b2d = jnp.pad(b, (0, OCp - OC)).reshape(1, OCp).astype(jnp.float32)

    out2d = gemm_bias_relu(patches, w2d, b2d, tm=tm)      # (M, OCp) f32
    out = out2d.reshape(N, OH, OW, OCp)[..., :OC]          # drop channel padding
    return out


# ----------------------------------------------------------------------------
# Parameter init (deterministic, mimics PyTorch Conv2d default kaiming-uniform)
# ----------------------------------------------------------------------------
def _init_conv(key, oc, ic, kh, kw):
    kw_, kb_ = jax.random.split(key)
    fan_in = ic * kh * kw
    bound = 1.0 / math.sqrt(fan_in)
    w = jax.random.uniform(kw_, (oc, ic, kh, kw), jnp.float32, -bound, bound)
    b = jax.random.uniform(kb_, (oc,), jnp.float32, -bound, bound)
    return w, b


def make_params(key):
    k1, k2, k3 = jax.random.split(key, 3)
    return {
        "c1": _init_conv(k1, 32, 4, 8, 8),
        "c2": _init_conv(k2, 64, 32, 4, 4),
        "c3": _init_conv(k3, 64, 64, 3, 3),
    }


def conv_block_forward(params, x_nchw, *, compute_dtype=jnp.bfloat16):
    """Full ConvBlock forward (batch_norm=False). x: (N,4,H,W) -> (N, 64*H3*W3)."""
    x = jnp.transpose(x_nchw, (0, 2, 3, 1))                 # NCHW -> NHWC once
    for name, stride in (("c1", 4), ("c2", 2), ("c3", 1)):
        w, b = params[name]
        x = conv2d_relu_nhwc(x, w, b, stride, compute_dtype=compute_dtype)
    # nn.Flatten() on NCHW: single transpose at the end reproduces torch order.
    x = jnp.transpose(x, (0, 3, 1, 2))
    return x.reshape(x.shape[0], -1)


# ----------------------------------------------------------------------------
# Pure-JAX references for validation.
#   compute_dtype=f32     : "true" answer (HIGHEST precision conv)
#   compute_dtype=bfloat16: same bf16-input / f32-accumulate arithmetic as the
#                           Pallas kernel -> tight comparison.
# ----------------------------------------------------------------------------
def _ref_forward(params, x, compute_dtype=jnp.float32):
    prec = jax.lax.Precision.HIGHEST if compute_dtype == jnp.float32 else None

    def conv(x, w, b, s):
        y = jax.lax.conv_general_dilated(
            x.astype(compute_dtype), w.astype(compute_dtype),
            window_strides=(s, s), padding="VALID",
            dimension_numbers=("NCHW", "OIHW", "NCHW"),
            preferred_element_type=jnp.float32,
            precision=prec)
        return jnp.maximum(y + b[None, :, None, None], 0.0)

    w1, b1 = params["c1"]; w2, b2 = params["c2"]; w3, b3 = params["c3"]
    x = conv(x, w1, b1, 4)
    x = conv(x, w2, b2, 2)
    x = conv(x, w3, b3, 1)
    return x.reshape(x.shape[0], -1)


if __name__ == "__main__":
    key = jax.random.PRNGKey(0)
    kx, kp = jax.random.split(key)

    # Smallest input that survives the conv chain: 36x36 -> 8x8 -> 3x3 -> 1x1
    N, C, H, W = 2, 4, 36, 36
    x = jax.random.normal(kx, (N, C, H, W), jnp.float32)
    params = make_params(kp)

    fwd = jax.jit(conv_block_forward)
    out = jax.block_until_ready(fwd(params, x))
    assert out.shape == (N, 64), out.shape

    # Tight check vs a reference using the same bf16-input / f32-accumulate math.
    ref_bf16 = _ref_forward(params, x, compute_dtype=jnp.bfloat16)
    assert jnp.allclose(out, ref_bf16, rtol=5e-3, atol=5e-3), \
        "mismatch vs bf16-matched reference"

    # Loose sanity check vs the full-precision f32 reference.
    ref_f32 = _ref_forward(params, x, compute_dtype=jnp.float32)
    assert jnp.allclose(out, ref_f32, rtol=5e-2, atol=2e-2), \
        "mismatch vs f32 reference"

    print("KERNEL_OK")
</pallas_src>

<mosaic_0001>
module attributes {stable_mosaic.version = 11 : i64} {
  func.func @_gemm_bias_relu_kernel(%arg0: i32, %arg1: memref<128x256xbf16, #tpu.memory_space<vmem>>, %arg2: memref<256x128xbf16, #tpu.memory_space<vmem>>, %arg3: memref<1x128xf32, #tpu.memory_space<vmem>>, %arg4: memref<128x128xf32, #tpu.memory_space<vmem>>) attributes {dimension_semantics = [#tpu.dimension_semantics<parallel>], iteration_bounds = array<i64: 1>, scalar_prefetch = 0 : i64, scratch_operands = 0 : i64, tpu.core_type = #tpu.core_type<tc>, window_params = [{transform_indices = @transform_0, window_bounds = array<i64: 128, 256>}, {pipeline_mode = #tpu.pipeline_mode<synchronous>, transform_indices = @transform_1, window_bounds = array<i64: 256, 128>}, {pipeline_mode = #tpu.pipeline_mode<synchronous>, transform_indices = @transform_2, window_bounds = array<i64: 1, 128>}, {transform_indices = @transform_3, window_bounds = array<i64: 128, 128>}]} {
    %c0 = arith.constant 0 : index
    %c0_0 = arith.constant 0 : index
    %0 = vector.load %arg1[%c0, %c0_0] : memref<128x256xbf16, #tpu.memory_space<vmem>>, vector<128x256xbf16>
    %c0_1 = arith.constant 0 : index
    %c0_2 = arith.constant 0 : index
    %1 = vector.load %arg2[%c0_1, %c0_2] : memref<256x128xbf16, #tpu.memory_space<vmem>>, vector<256x128xbf16>
    %cst = arith.constant dense<0.000000e+00> : vector<128x128xf32>
    %2 = tpu.matmul %0, %1, %cst {dimension_numbers = #tpu.dot_dimension_numbers<[1], [0], [0], [1], [0, 0, 1, 1], [], []>} : vector<128x256xbf16>, vector<256x128xbf16>, vector<128x128xf32> -> vector<128x128xf32>
    %c0_3 = arith.constant 0 : index
    %c0_4 = arith.constant 0 : index
    %3 = vector.load %arg3[%c0_3, %c0_4] : memref<1x128xf32, #tpu.memory_space<vmem>>, vector<1x128xf32>
    %4 = vector.broadcast %3 : vector<1x128xf32> to vector<128x128xf32>
    %5 = arith.addf %2, %4 : vector<128x128xf32>
    %cst_5 = arith.constant 0.000000e+00 : f32
    %6 = vector.broadcast %cst_5 : f32 to vector<128x128xf32>
    %7 = arith.maximumf %5, %6 : vector<128x128xf32>
    %c0_6 = arith.constant 0 : index
    %c0_7 = arith.constant 0 : index
    %8 = vector.load %arg4[%c0_6, %c0_7] : memref<128x128xf32, #tpu.memory_space<vmem>>, vector<128x128xf32>
    tpu.vector_store %arg4[%c0_6, %c0_7], %7 {strides = array<i32>} : memref<128x128xf32, #tpu.memory_space<vmem>>, vector<128x128xf32>,
    return
  }
  func.func @transform_0(%arg0: i32) -> (i32, i32) {
    %c0_i32 = arith.constant 0 : i32
    %c0_i32_0 = arith.constant 0 : i32
    return %arg0, %c0_i32 : i32, i32
  }
  func.func @transform_1(%arg0: i32) -> (i32, i32) {
    %c0_i32 = arith.constant 0 : i32
    %c0_i32_0 = arith.constant 0 : i32
    %c0_i32_1 = arith.constant 0 : i32
    return %c0_i32, %c0_i32_0 : i32, i32
  }
  func.func @transform_2(%arg0: i32) -> (i32, i32) {
    %c0_i32 = arith.constant 0 : i32
    %c0_i32_0 = arith.constant 0 : i32
    %c0_i32_1 = arith.constant 0 : i32
    return %c0_i32, %c0_i32_0 : i32, i32
  }
  func.func @transform_3(%arg0: i32) -> (i32, i32) {
    %c0_i32 = arith.constant 0 : i32
    %c0_i32_0 = arith.constant 0 : i32
    return %arg0, %c0_i32 : i32, i32
  }
}

module attributes {stable_mosaic.version = 11 : i64} {
  func.func @_gemm_bias_relu_kernel(%arg0: i32, %arg1: memref<32x512xbf16, #tpu.memory_space<vmem>>, %arg2: memref<512x128xbf16, #tpu.memory_space<vmem>>, %arg3: memref<1x128xf32, #tpu.memory_space<vmem>>, %arg4: memref<32x128xf32, #tpu.memory_space<vmem>>) attributes {dimension_semantics = [#tpu.dimension_semantics<parallel>], iteration_bounds = array<i64: 1>, scalar_prefetch = 0 : i64, scratch_operands = 0 : i64, tpu.core_type = #tpu.core_type<tc>, window_params = [{transform_indices = @transform_0, window_bounds = array<i64: 32, 512>}, {pipeline_mode = #tpu.pipeline_mode<synchronous>, transform_indices = @transform_1, window_bounds = array<i64: 512, 128>}, {pipeline_mode = #tpu.pipeline_mode<synchronous>, transform_indices = @transform_2, window_bounds = array<i64: 1, 128>}, {transform_indices = @transform_3, window_bounds = array<i64: 32, 128>}]} {
    %c0 = arith.constant 0 : index
    %c0_0 = arith.constant 0 : index
    %0 = vector.load %arg1[%c0, %c0_0] : memref<32x512xbf16, #tpu.memory_space<vmem>>, vector<32x512xbf16>
    %c0_1 = arith.constant 0 : index
    %c0_2 = arith.constant 0 : index
    %1 = vector.load %arg2[%c0_1, %c0_2] : memref<512x128xbf16, #tpu.memory_space<vmem>>, vector<512x128xbf16>
    %cst = arith.constant dense<0.000000e+00> : vector<32x128xf32>
    %2 = tpu.matmul %0, %1, %cst {dimension_numbers = #tpu.dot_dimension_numbers<[1], [0], [0], [1], [0, 0, 1, 1], [], []>} : vector<32x512xbf16>, vector<512x128xbf16>, vector<32x128xf32> -> vector<32x128xf32>
    %c0_3 = arith.constant 0 : index
    %c0_4 = arith.constant 0 : index
    %3 = vector.load %arg3[%c0_3, %c0_4] : memref<1x128xf32, #tpu.memory_space<vmem>>, vector<1x128xf32>
    %4 = vector.broadcast %3 : vector<1x128xf32> to vector<32x128xf32>
    %5 = arith.addf %2, %4 : vector<32x128xf32>
    %cst_5 = arith.constant 0.000000e+00 : f32
    %6 = vector.broadcast %cst_5 : f32 to vector<32x128xf32>
    %7 = arith.maximumf %5, %6 : vector<32x128xf32>
    %c0_6 = arith.constant 0 : index
    %c0_7 = arith.constant 0 : index
    %8 = vector.load %arg4[%c0_6, %c0_7] : memref<32x128xf32, #tpu.memory_space<vmem>>, vector<32x128xf32>
    tpu.vector_store %arg4[%c0_6, %c0_7], %7 {strides = array<i32>} : memref<32x128xf32, #tpu.memory_space<vmem>>, vector<32x128xf32>,
    return
  }
  func.func @transform_0(%arg0: i32) -> (i32, i32) {
    %c0_i32 = arith.constant 0 : i32
    %c0_i32_0 = arith.constant 0 : i32
    return %arg0, %c0_i32 : i32, i32
  }
  func.func @transform_1(%arg0: i32) -> (i32, i32) {
    %c0_i32 = arith.constant 0 : i32
    %c0_i32_0 = arith.constant 0 : i32
    %c0_i32_1 = arith.constant 0 : i32
    return %c0_i32, %c0_i32_0 : i32, i32
  }
  func.func @transform_2(%arg0: i32) -> (i32, i32) {
    %c0_i32 = arith.constant 0 : i32
    %c0_i32_0 = arith.constant 0 : i32
    %c0_i32_1 = arith.constant 0 : i32
    return %c0_i32, %c0_i32_0 : i32, i32
  }
  func.func @transform_3(%arg0: i32) -> (i32, i32) {
    %c0_i32 = arith.constant 0 : i32
    %c0_i32_0 = arith.constant 0 : i32
    return %arg0, %c0_i32 : i32, i32
  }
}

module attributes {stable_mosaic.version = 11 : i64} {
  func.func @_gemm_bias_relu_kernel(%arg0: i32, %arg1: memref<16x640xbf16, #tpu.memory_space<vmem>>, %arg2: memref<640x128xbf16, #tpu.memory_space<vmem>>, %arg3: memref<1x128xf32, #tpu.memory_space<vmem>>, %arg4: memref<16x128xf32, #tpu.memory_space<vmem>>) attributes {dimension_semantics = [#tpu.dimension_semantics<parallel>], iteration_bounds = array<i64: 1>, scalar_prefetch = 0 : i64, scratch_operands = 0 : i64, tpu.core_type = #tpu.core_type<tc>, window_params = [{transform_indices = @transform_0, window_bounds = array<i64: 16, 640>}, {pipeline_mode = #tpu.pipeline_mode<synchronous>, transform_indices = @transform_1, window_bounds = array<i64: 640, 128>}, {pipeline_mode = #tpu.pipeline_mode<synchronous>, transform_indices = @transform_2, window_bounds = array<i64: 1, 128>}, {transform_indices = @transform_3, window_bounds = array<i64: 16, 128>}]} {
    %c0 = arith.constant 0 : index
    %c0_0 = arith.constant 0 : index
    %0 = vector.load %arg1[%c0, %c0_0] : memref<16x640xbf16, #tpu.memory_space<vmem>>, vector<16x640xbf16>
    %c0_1 = arith.constant 0 : index
    %c0_2 = arith.constant 0 : index
    %1 = vector.load %arg2[%c0_1, %c0_2] : memref<640x128xbf16, #tpu.memory_space<vmem>>, vector<640x128xbf16>
    %cst = arith.constant dense<0.000000e+00> : vector<16x128xf32>
    %2 = tpu.matmul %0, %1, %cst {dimension_numbers = #tpu.dot_dimension_numbers<[1], [0], [0], [1], [0, 0, 1, 1], [], []>} : vector<16x640xbf16>, vector<640x128xbf16>, vector<16x128xf32> -> vector<16x128xf32>
    %c0_3 = arith.constant 0 : index
    %c0_4 = arith.constant 0 : index
    %3 = vector.load %arg3[%c0_3, %c0_4] : memref<1x128xf32, #tpu.memory_space<vmem>>, vector<1x128xf32>
    %4 = vector.broadcast %3 : vector<1x128xf32> to vector<16x128xf32>
    %5 = arith.addf %2, %4 : vector<16x128xf32>
    %cst_5 = arith.constant 0.000000e+00 : f32
    %6 = vector.broadcast %cst_5 : f32 to vector<16x128xf32>
    %7 = arith.maximumf %5, %6 : vector<16x128xf32>
    %c0_6 = arith.constant 0 : index
    %c0_7 = arith.constant 0 : index
    %8 = vector.load %arg4[%c0_6, %c0_7] : memref<16x128xf32, #tpu.memory_space<vmem>>, vector<16x128xf32>
    tpu.vector_store %arg4[%c0_6, %c0_7], %7 {strides = array<i32>} : memref<16x128xf32, #tpu.memory_space<vmem>>, vector<16x128xf32>,
    return
  }
  func.func @transform_0(%arg0: i32) -> (i32, i32) {
    %c0_i32 = arith.constant 0 : i32
    %c0_i32_0 = arith.constant 0 : i32
    return %arg0, %c0_i32 : i32, i32
  }
  func.func @transform_1(%arg0: i32) -> (i32, i32) {
    %c0_i32 = arith.constant 0 : i32
    %c0_i32_0 = arith.constant 0 : i32
    %c0_i32_1 = arith.constant 0 : i32
    return %c0_i32, %c0_i32_0 : i32, i32
  }
  func.func @transform_2(%arg0: i32) -> (i32, i32) {
    %c0_i32 = arith.constant 0 : i32
    %c0_i32_0 = arith.constant 0 : i32
    %c0_i32_1 = arith.constant 0 : i32
    return %c0_i32, %c0_i32_0 : i32, i32
  }
  func.func @transform_3(%arg0: i32) -> (i32, i32) {
    %c0_i32 = arith.constant 0 : i32
    %c0_i32_0 = arith.constant 0 : i32
    return %arg0, %c0_i32 : i32, i32
  }
}

</mosaic_0001>

<llo_original>
// kernel: conv_block_forward.3
$region0: #{conv_block_forward.3}
  #allocation0 [shape = 'u32[]', space=smem, size = 0x4, offset = 0x4, fixed_abs, tag = 'smem constant byte address 0x4 - core index']
  #allocation1 [shape = 'u32[144,128]{1,0:T(1,128)}', space=vmem, size = 0x12000, scoped, tag = 'internal scratch']
  %s0 = inlined_call_operand.vmem [shape: bf16[128,256], index: 0, kind: input, shape index: {}]
  %s1 = inlined_call_operand.vmem [shape: bf16[256,128], index: 1, kind: input, shape index: {}]
  %s2 = inlined_call_operand.vmem [shape: f32[1,128], index: 2, kind: input, shape index: {}]
  %s3 = inlined_call_operand.vmem [shape: f32[128,128], index: 3, kind: output, shape index: {}]
  %s4 = sld [smem:[#allocation0]]
  $region22: #{conv_block_forward.3} parent=0
    _
  %s6 = ssub.s32 1, %s4
  %s7 = scalar_select 0, %s6, %s4
  // Predicated region
  $region2: #{conv_block_forward.3} parent=0 // pred_check
    _
  $region3: #{conv_block_forward.3} parent=0 // pred_check_branch
    %9 = sbr.rel (0) target = $region5
  $region4: #{conv_block_forward.3} parent=0 // pred_region
    _
  $region5: #{conv_block_forward.3} parent=0 // pred_fallthru
    _
  // Predicated region
  $region6: #{conv_block_forward.3} parent=0 // pred_check
    _
  $region7: #{conv_block_forward.3} parent=0 // pred_check_branch
    %11 = sbr.rel (0) target = $region9
  $region8: #{conv_block_forward.3} parent=0 // pred_region
    _
  $region9: #{conv_block_forward.3} parent=0 // pred_fallthru
    _
  // Predicated region
  $region10: #{conv_block_forward.3} parent=0 // pred_check
    _
  $region11: #{conv_block_forward.3} parent=0 // pred_check_branch
    %13 = sbr.rel (0) target = $region13
  $region12: #{conv_block_forward.3} parent=0 // pred_region
    _
  $region13: #{conv_block_forward.3} parent=0 // pred_fallthru
    _
  %v15 = vld [vmem:[%s0] sm:$0xff]
  %v16 = vld [vmem:[%s0 + $0x8] sm:$0xff]
  %v17 = vld [vmem:[%s0 + $0x10] sm:$0xff]
  %v18 = vld [vmem:[%s0 + $0x18] sm:$0xff]
  %v19 = vld [vmem:[%s0 + $0x20] sm:$0xff]
  %v20 = vld [vmem:[%s0 + $0x28] sm:$0xff]
  %v21 = vld [vmem:[%s0 + $0x30] sm:$0xff]
  %v22 = vld [vmem:[%s0 + $0x38] sm:$0xff]
  %v23 = vld [vmem:[%s0 + $0x40] sm:$0xff]
  %v24 = vld [vmem:[%s0 + $0x48] sm:$0xff]
  %v25 = vld [vmem:[%s0 + $0x50] sm:$0xff]
  %v26 = vld [vmem:[%s0 + $0x58] sm:$0xff]
  %v27 = vld [vmem:[%s0 + $0x60] sm:$0xff]
  %v28 = vld [vmem:[%s0 + $0x68] sm:$0xff]
  %v29 = vld [vmem:[%s0 + $0x70] sm:$0xff]
  %v30 = vld [vmem:[%s0 + $0x78] sm:$0xff]
  %v31 = vld [vmem:[%s1] sm:$0xf]
  %v32 = vld [vmem:[%s1 + $0x4] sm:$0xf]
  %v33 = vld [vmem:[%s1 + $0x8] sm:$0xf]
  %v34 = vld [vmem:[%s1 + $0xc] sm:$0xf]
  %v35 = vld [vmem:[%s1 + $0x10] sm:$0xf]
  %v36 = vld [vmem:[%s1 + $0x14] sm:$0xf]
  %v37 = vld [vmem:[%s1 + $0x18] sm:$0xf]
  %v38 = vld [vmem:[%s1 + $0x1c] sm:$0xf]
  %v39 = vld [vmem:[%s1 + $0x20] sm:$0xf]
  %v40 = vld [vmem:[%s1 + $0x24] sm:$0xf]
  %v41 = vld [vmem:[%s1 + $0x28] sm:$0xf]
  %v42 = vld [vmem:[%s1 + $0x2c] sm:$0xf]
  %v43 = vld [vmem:[%s1 + $0x30] sm:$0xf]
  %v44 = vld [vmem:[%s1 + $0x34] sm:$0xf]
  %v45 = vld [vmem:[%s1 + $0x38] sm:$0xf]
  %v46 = vld [vmem:[%s1 + $0x3c] sm:$0xf]
  %v47 = vld [vmem:[%s1 + $0x40] sm:$0xf]
  %v48 = vld [vmem:[%s1 + $0x44] sm:$0xf]
  %v49 = vld [vmem:[%s1 + $0x48] sm:$0xf]
  %v50 = vld [vmem:[%s1 + $0x4c] sm:$0xf]
  %v51 = vld [vmem:[%s1 + $0x50] sm:$0xf]
  %v52 = vld [vmem:[%s1 + $0x54] sm:$0xf]
  %v53 = vld [vmem:[%s1 + $0x58] sm:$0xf]
  %v54 = vld [vmem:[%s1 + $0x5c] sm:$0xf]
  %v55 = vld [vmem:[%s1 + $0x60] sm:$0xf]
  %v56 = vld [vmem:[%s1 + $0x64] sm:$0xf]
  %v57 = vld [vmem:[%s1 + $0x68] sm:$0xf]
  %v58 = vld [vmem:[%s1 + $0x6c] sm:$0xf]
  %v59 = vld [vmem:[%s1 + $0x70] sm:$0xf]
  %v60 = vld [vmem:[%s1 + $0x74] sm:$0xf]
  %v61 = vld [vmem:[%s1 + $0x78] sm:$0xf]
  %v62 = vld [vmem:[%s1 + $0x7c] sm:$0xf]
  %v63 = vld [vmem:[%s2] sm:$0x1]
  %v65 = vlaneseq
  %v66 = vshrl.u32 %v65, 7
  %v67 = vsub.s32 0, %v66
  %v68 = vrot.slane %v63, %v67
  %v86 = vunpack.c.l.b16 %v15
  %v87 = vunpack.c.h.b16 %v15
  %v88 = vunpack.c.l.b16 %v16
  %v89 = vunpack.c.h.b16 %v16
  %v90 = vunpack.c.l.b16 %v17
  %v91 = vunpack.c.h.b16 %v17
  %v92 = vunpack.c.l.b16 %v18
  %v93 = vunpack.c.h.b16 %v18
  %v94 = vunpack.c.l.b16 %v19
  %v95 = vunpack.c.h.b16 %v19
  %v96 = vunpack.c.l.b16 %v20
  %v97 = vunpack.c.h.b16 %v20
  %v98 = vunpack.c.l.b16 %v21
  %v99 = vunpack.c.h.b16 %v21
  %v100 = vunpack.c.l.b16 %v22
  %v101 = vunpack.c.h.b16 %v22
  %v102 = vunpack.c.l.b16 %v23
  %v103 = vunpack.c.h.b16 %v23
  %v104 = vunpack.c.l.b16 %v24
  %v105 = vunpack.c.h.b16 %v24
  %v106 = vunpack.c.l.b16 %v25
  %v107 = vunpack.c.h.b16 %v25
  %v108 = vunpack.c.l.b16 %v26
  %v109 = vunpack.c.h.b16 %v26
  %v110 = vunpack.c.l.b16 %v27
  %v111 = vunpack.c.h.b16 %v27
  %v112 = vunpack.c.l.b16 %v28
  %v113 = vunpack.c.h.b16 %v28
  %v114 = vunpack.c.l.b16 %v29
  %v115 = vunpack.c.h.b16 %v29
  %v116 = vunpack.c.l.b16 %v30
  %v117 = vunpack.c.h.b16 %v30
  %v118 = vpack.c.b16 %v88, %v86
  %v119 = vpack.c.b16 %v89, %v87
  %v120 = vpack.c.b16 %v92, %v90
  %v121 = vpack.c.b16 %v93, %v91
  %v122 = vpack.c.b16 %v96, %v94
  %v123 = vpack.c.b16 %v97, %v95
  %v124 = vpack.c.b16 %v100, %v98
  %v125 = vpack.c.b16 %v101, %v99
  %v126 = vpack.c.b16 %v104, %v102
  %v127 = vpack.c.b16 %v105, %v103
  %v128 = vpack.c.b16 %v108, %v106
  %v129 = vpack.c.b16 %v109, %v107
  %v130 = vpack.c.b16 %v112, %v110
  %v131 = vpack.c.b16 %v113, %v111
  %v132 = vpack.c.b16 %v116, %v114
  %v133 = vpack.c.b16 %v117, %v115
  %v182 = vunpack.c.l.b16 %v31
  %v183 = vunpack.c.l.b16 %v32
  %v184 = vunpack.c.l.b16 %v33
  %v185 = vunpack.c.l.b16 %v34
  %v186 = vunpack.c.l.b16 %v35
  %v187 = vunpack.c.l.b16 %v36
  %v188 = vunpack.c.l.b16 %v37
  %v189 = vunpack.c.l.b16 %v38
  %v190 = vunpack.c.l.b16 %v39
  %v191 = vunpack.c.l.b16 %v40
  %v192 = vunpack.c.l.b16 %v41
  %v193 = vunpack.c.l.b16 %v42
  %v194 = vunpack.c.l.b16 %v43
  %v195 = vunpack.c.l.b16 %v44
  %v196 = vunpack.c.l.b16 %v45
  %v197 = vunpack.c.l.b16 %v46
  %v198 = vunpack.c.l.b16 %v47
  %v199 = vunpack.c.l.b16 %v48
  %v200 = vunpack.c.l.b16 %v49
  %v201 = vunpack.c.l.b16 %v50
  %v202 = vunpack.c.l.b16 %v51
  %v203 = vunpack.c.l.b16 %v52
  %v204 = vunpack.c.l.b16 %v53
  %v205 = vunpack.c.l.b16 %v54
  %v206 = vunpack.c.l.b16 %v55
  %v207 = vunpack.c.l.b16 %v56
  %v208 = vunpack.c.l.b16 %v57
  %v209 = vunpack.c.l.b16 %v58
  %v210 = vunpack.c.l.b16 %v59
  %v211 = vunpack.c.l.b16 %v60
  %v212 = vunpack.c.l.b16 %v61
  %v213 = vunpack.c.l.b16 %v62
  %v214 = vpack.c.b16 %v183, %v182
  %v215 = vpack.c.b16 %v185, %v184
  %v216 = vpack.c.b16 %v187, %v186
  %v217 = vpack.c.b16 %v189, %v188
  %v218 = vpack.c.b16 %v191, %v190
  %v219 = vpack.c.b16 %v193, %v192
  %v220 = vpack.c.b16 %v195, %v194
  %v221 = vpack.c.b16 %v197, %v196
  %v222 = vpack.c.b16 %v199, %v198
  %v223 = vpack.c.b16 %v201, %v200
  %v224 = vpack.c.b16 %v203, %v202
  %v225 = vpack.c.b16 %v205, %v204
  %v226 = vpack.c.b16 %v207, %v206
  %v227 = vpack.c.b16 %v209, %v208
  %v228 = vpack.c.b16 %v211, %v210
  %v229 = vpack.c.b16 %v213, %v212
  %246 = vmatprep.subr.bf16.mxu0 0
  %247 = vmatpush1.bf16.msra.mxu0 %v214
  %248 = vmatprep.subr.bf16.mxu0 0
  %249 = vmatpush1.bf16.msra.mxu0 %v215
  %250 = vmatprep.subr.bf16.mxu0 0
  %251 = vmatpush1.bf16.msra.mxu0 %v216
  %252 = vmatprep.subr.bf16.mxu0 0
  %253 = vmatpush1.bf16.msra.mxu0 %v217
  %254 = vmatprep.subr.bf16.mxu0 0
  %255 = vmatpush1.bf16.msra.mxu0 %v218
  %256 = vmatprep.subr.bf16.mxu0 0
  %257 = vmatpush1.bf16.msra.mxu0 %v219
  %258 = vmatprep.subr.bf16.mxu0 0
  %259 = vmatpush1.bf16.msra.mxu0 %v220
  %260 = vmatprep.subr.bf16.mxu0 0
  %261 = vmatpush1.bf16.msra.mxu0 %v221
  %262 = vmatprep.subr.bf16.mxu0 0
  %263 = vmatpush1.bf16.msra.mxu0 %v222
  %264 = vmatprep.subr.bf16.mxu0 0
  %265 = vmatpush1.bf16.msra.mxu0 %v223
  %266 = vmatprep.subr.bf16.mxu0 0
  %267 = vmatpush1.bf16.msra.mxu0 %v224
  %268 = vmatprep.subr.bf16.mxu0 0
  %269 = vmatpush1.bf16.msra.mxu0 %v225
  %270 = vmatprep.subr.bf16.mxu0 0
  %271 = vmatpush1.bf16.msra.mxu0 %v226
  %272 = vmatprep.subr.bf16.mxu0 0
  %273 = vmatpush1.bf16.msra.mxu0 %v227
  %274 = vmatprep.subr.bf16.mxu0 0
  %275 = vmatpush1.bf16.msra.mxu0 %v228
  %276 = vmatprep.subr.bf16.mxu0 0
  %277 = vmatpush1.bf16.msra.mxu0 %v229
  %278 = vmatprep.mubr.bf16.mxu0 %v119
  %279 = vmatmul.mubr.bf16.gmra.mrb[0].mxu0 %v118
  %v280 = vpop.f32.mrb[0].mxu0
  %v281 = vadd.f32 %v68, %v280
  %v282 = vpop.f32.mrb[0].mxu0
  %v283 = vpop.f32.mrb[0].mxu0
  %v284 = vadd.f32 %v68, %v283
  %v285 = vpop.f32.mrb[0].mxu0
  %286 = vmatprep.mubr.bf16.mxu0 %v121
  %287 = vmatmul.mubr.bf16.gmra.mrb[0].mxu0 %v120
  %v288 = vpop.f32.mrb[0].mxu0
  %v289 = vadd.f32 %v68, %v288
  %v290 = vpop.f32.mrb[0].mxu0
  %v291 = vpop.f32.mrb[0].mxu0
  %v292 = vadd.f32 %v68, %v291
  %v293 = vpop.f32.mrb[0].mxu0
  %294 = vmatprep.mubr.bf16.mxu0 %v123
  %295 = vmatmul.mubr.bf16.gmra.mrb[0].mxu0 %v122
  %v296 = vpop.f32.mrb[0].mxu0
  %v297 = vadd.f32 %v68, %v296
  %v298 = vpop.f32.mrb[0].mxu0
  %v299 = vpop.f32.mrb[0].mxu0
  %v300 = vadd.f32 %v68, %v299
  %v301 = vpop.f32.mrb[0].mxu0
  %302 = vmatprep.mubr.bf16.mxu0 %v125
  %303 = vmatmul.mubr.bf16.gmra.mrb[0].mxu0 %v124
  %v304 = vpop.f32.mrb[0].mxu0
  %v305 = vadd.f32 %v68, %v304
  %v306 = vpop.f32.mrb[0].mxu0
  %v307 = vpop.f32.mrb[0].mxu0
  %v308 = vadd.f32 %v68, %v307
  %v309 = vpop.f32.mrb[0].mxu0
  %310 = vmatprep.mubr.bf16.mxu0 %v127
  %311 = vmatmul.mubr.bf16.gmra.mrb[0].mxu0 %v126
  %v312 = vpop.f32.mrb[0].mxu0
  %v313 = vadd.f32 %v68, %v312
  %v314 = vpop.f32.mrb[0].mxu0
  %v315 = vpop.f32.mrb[0].mxu0
  %v316 = vadd.f32 %v68, %v315
  %v317 = vpop.f32.mrb[0].mxu0
  %318 = vmatprep.mubr.bf16.mxu0 %v129
  %319 = vmatmul.mubr.bf16.gmra.mrb[0].mxu0 %v128
  %v320 = vpop.f32.mrb[0].mxu0
  %v321 = vadd.f32 %v68, %v320
  %v322 = vpop.f32.mrb[0].mxu0
  %v323 = vpop.f32.mrb[0].mxu0
  %v324 = vadd.f32 %v68, %v323
  %v325 = vpop.f32.mrb[0].mxu0
  %326 = vmatprep.mubr.bf16.mxu0 %v131
  %327 = vmatmul.mubr.bf16.gmra.mrb[0].mxu0 %v130
  %v328 = vpop.f32.mrb[0].mxu0
  %v329 = vadd.f32 %v68, %v328
  %v330 = vpop.f32.mrb[0].mxu0
  %v331 = vpop.f32.mrb[0].mxu0
  %v332 = vadd.f32 %v68, %v331
  %v333 = vpop.f32.mrb[0].mxu0
  %334 = vmatprep.mubr.bf16.mxu0 %v133
  %335 = vmatmul.mubr.bf16.gmra.mrb[0].mxu0 %v132
  %v336 = vpop.f32.mrb[0].mxu0
  %v337 = vadd.f32 %v68, %v336
  %v338 = vpop.f32.mrb[0].mxu0
  %v339 = vpop.f32.mrb[0].mxu0
  %v340 = vadd.f32 %v68, %v339
  %v341 = vpop.f32.mrb[0].mxu0
  %342 = vdwg.mxu0
  %v343 = vmax.f32 %v281, 0.0
  %v344 = vmax.f32 %v284, 0.0
  %v345 = vmax.f32 %v289, 0.0
  %v346 = vmax.f32 %v292, 0.0
  %v347 = vmax.f32 %v297, 0.0
  %v348 = vmax.f32 %v300, 0.0
  %v349 = vmax.f32 %v305, 0.0
  %v350 = vmax.f32 %v308, 0.0
  %v351 = vmax.f32 %v313, 0.0
  %v352 = vmax.f32 %v316, 0.0
  %v353 = vmax.f32 %v321, 0.0
  %v354 = vmax.f32 %v324, 0.0
  %v355 = vmax.f32 %v329, 0.0
  %v356 = vmax.f32 %v332, 0.0
  %v357 = vmax.f32 %v337, 0.0
  %v358 = vmax.f32 %v340, 0.0
  %359 = vst [vmem:[%s3] sm:$0xff] %v343
  %360 = vst [vmem:[%s3 + $0x8] sm:$0xff] %v344
  %361 = vst [vmem:[%s3 + $0x10] sm:$0xff] %v345
  %362 = vst [vmem:[%s3 + $0x18] sm:$0xff] %v346
  %363 = vst [vmem:[%s3 + $0x20] sm:$0xff] %v347
  %364 = vst [vmem:[%s3 + $0x28] sm:$0xff] %v348
  %365 = vst [vmem:[%s3 + $0x30] sm:$0xff] %v349
  %366 = vst [vmem:[%s3 + $0x38] sm:$0xff] %v350
  %367 = vst [vmem:[%s3 + $0x40] sm:$0xff] %v351
  %368 = vst [vmem:[%s3 + $0x48] sm:$0xff] %v352
  %369 = vst [vmem:[%s3 + $0x50] sm:$0xff] %v353
  %370 = vst [vmem:[%s3 + $0x58] sm:$0xff] %v354
  %371 = vst [vmem:[%s3 + $0x60] sm:$0xff] %v355
  %372 = vst [vmem:[%s3 + $0x68] sm:$0xff] %v356
  %373 = vst [vmem:[%s3 + $0x70] sm:$0xff] %v357
  %374 = vst [vmem:[%s3 + $0x78] sm:$0xff] %v358
  // Predicated region
  $region14: #{conv_block_forward.3} parent=0 // pred_check
    _
  $region15: #{conv_block_forward.3} parent=0 // pred_check_branch
    %376 = sbr.rel (0) target = $region17
  $region16: #{conv_block_forward.3} parent=0 // pred_region
    _
  $region17: #{conv_block_forward.3} parent=0 // pred_fallthru
    _
  // Predicated region
  $region18: #{conv_block_forward.3} parent=0 // pred_check
    _
  $region19: #{conv_block_forward.3} parent=0 // pred_check_branch
    %378 = sbr.rel (0) target = $region21
  $region20: #{conv_block_forward.3} parent=0 // pred_region
    _
  $region21: #{conv_block_forward.3} parent=0 // pred_fallthru
    _

// kernel: conv_block_forward.4
$region0: #{conv_block_forward.4}
  #allocation0 [shape = 'u32[]', space=smem, size = 0x4, offset = 0x4, fixed_abs, tag = 'smem constant byte address 0x4 - core index']
  #allocation1 [shape = 'u32[144,128]{1,0:T(1,128)}', space=vmem, size = 0x12000, scoped, tag = 'internal scratch']
  %s0 = inlined_call_operand.vmem [shape: bf16[18,512], index: 0, kind: input, shape index: {}]
  %s1 = inlined_call_operand.vmem [shape: bf16[512,128], index: 1, kind: input, shape index: {}]
  %s2 = inlined_call_operand.vmem [shape: f32[1,128], index: 2, kind: input, shape index: {}]
  %s3 = inlined_call_operand.vmem [shape: f32[18,128], index: 3, kind: output, shape index: {}]
  %s4 = sld [smem:[#allocation0]]
  $region56: #{conv_block_forward.4} parent=0
    _
  %s6 = ssub.s32 1, %s4
  %s7 = scalar_select 0, %s6, %s4
  $region1: #{conv_block_forward.4} parent=0
    #allocation2 [shape = 'u8[16384]{0}', space=vmem, size = 0x4000, scoped, tag = 'output window, operand 0, single buffered']
    // Predicated region
    $region2: #{conv_block_forward.4} parent=1 // pred_check
      _
    $region3: #{conv_block_forward.4} parent=1 // pred_check_branch
      %9 = sbr.rel (0) target = $region5
    $region4: #{conv_block_forward.4} parent=1 // pred_region
      _
    $region5: #{conv_block_forward.4} parent=1 // pred_fallthru
      _
    // Predicated region
    $region6: #{conv_block_forward.4} parent=1 // pred_check
      _
    $region7: #{conv_block_forward.4} parent=1 // pred_check_branch
      %11 = sbr.rel (0) target = $region9
    $region8: #{conv_block_forward.4} parent=1 // pred_region
      _
    $region9: #{conv_block_forward.4} parent=1 // pred_fallthru
      _
    // Predicated region
    $region10: #{conv_block_forward.4} parent=1 // pred_check
      _
    $region11: #{conv_block_forward.4} parent=1 // pred_check_branch
      %13 = sbr.rel (0) target = $region13
    $region12: #{conv_block_forward.4} parent=1 // pred_region
      _
    $region13: #{conv_block_forward.4} parent=1 // pred_fallthru
      _
    %v15 = vld [vmem:[%s0] sm:$0xff]
    %v16 = vld [vmem:[%s0 + $0x8] sm:$0xff]
    %v17 = vld [vmem:[%s0 + $0x10] sm:$0xff]
    %v18 = vld [vmem:[%s0 + $0x18] sm:$0xff]
    %v19 = vld [vmem:[%s0 + $0x20] sm:$0xff]
    %v20 = vld [vmem:[%s0 + $0x28] sm:$0xff]
    %v21 = vld [vmem:[%s0 + $0x30] sm:$0xff]
    %v22 = vld [vmem:[%s0 + $0x38] sm:$0xff]
    %v23 = vld [vmem:[%s1] sm:$0xf]
    %v24 = vld [vmem:[%s1 + $0x4] sm:$0xf]
    %v25 = vld [vmem:[%s1 + $0x8] sm:$0xf]
    %v26 = vld [vmem:[%s1 + $0xc] sm:$0xf]
    %v27 = vld [vmem:[%s1 + $0x10] sm:$0xf]
    %v28 = vld [vmem:[%s1 + $0x14] sm:$0xf]
    %v29 = vld [vmem:[%s1 + $0x18] sm:$0xf]
    %v30 = vld [vmem:[%s1 + $0x1c] sm:$0xf]
    %v31 = vld [vmem:[%s1 + $0x20] sm:$0xf]
    %v32 = vld [vmem:[%s1 + $0x24] sm:$0xf]
    %v33 = vld [vmem:[%s1 + $0x28] sm:$0xf]
    %v34 = vld [vmem:[%s1 + $0x2c] sm:$0xf]
    %v35 = vld [vmem:[%s1 + $0x30] sm:$0xf]
    %v36 = vld [vmem:[%s1 + $0x34] sm:$0xf]
    %v37 = vld [vmem:[%s1 + $0x38] sm:$0xf]
    %v38 = vld [vmem:[%s1 + $0x3c] sm:$0xf]
    %v39 = vld [vmem:[%s1 + $0x40] sm:$0xf]
    %v40 = vld [vmem:[%s1 + $0x44] sm:$0xf]
    %v41 = vld [vmem:[%s1 + $0x48] sm:$0xf]
    %v42 = vld [vmem:[%s1 + $0x4c] sm:$0xf]
    %v43 = vld [vmem:[%s1 + $0x50] sm:$0xf]
    %v44 = vld [vmem:[%s1 + $0x54] sm:$0xf]
    %v45 = vld [vmem:[%s1 + $0x58] sm:$0xf]
    %v46 = vld [vmem:[%s1 + $0x5c] sm:$0xf]
    %v47 = vld [vmem:[%s1 + $0x60] sm:$0xf]
    %v48 = vld [vmem:[%s1 + $0x64] sm:$0xf]
    %v49 = vld [vmem:[%s1 + $0x68] sm:$0xf]
    %v50 = vld [vmem:[%s1 + $0x6c] sm:$0xf]
    %v51 = vld [vmem:[%s1 + $0x70] sm:$0xf]
    %v52 = vld [vmem:[%s1 + $0x74] sm:$0xf]
    %v53 = vld [vmem:[%s1 + $0x78] sm:$0xf]
    %v54 = vld [vmem:[%s1 + $0x7c] sm:$0xf]
    %v55 = vld [vmem:[%s1 + $0x80] sm:$0xf]
    %v56 = vld [vmem:[%s1 + $0x84] sm:$0xf]
    %v57 = vld [vmem:[%s1 + $0x88] sm:$0xf]
    %v58 = vld [vmem:[%s1 + $0x8c] sm:$0xf]
    %v59 = vld [vmem:[%s1 + $0x90] sm:$0xf]
    %v60 = vld [vmem:[%s1 + $0x94] sm:$0xf]
    %v61 = vld [vmem:[%s1 + $0x98] sm:$0xf]
    %v62 = vld [vmem:[%s1 + $0x9c] sm:$0xf]
    %v63 = vld [vmem:[%s1 + $0xa0] sm:$0xf]
    %v64 = vld [vmem:[%s1 + $0xa4] sm:$0xf]
    %v65 = vld [vmem:[%s1 + $0xa8] sm:$0xf]
    %v66 = vld [vmem:[%s1 + $0xac] sm:$0xf]
    %v67 = vld [vmem:[%s1 + $0xb0] sm:$0xf]
    %v68 = vld [vmem:[%s1 + $0xb4] sm:$0xf]
    %v69 = vld [vmem:[%s1 + $0xb8] sm:$0xf]
    %v70 = vld [vmem:[%s1 + $0xbc] sm:$0xf]
    %v71 = vld [vmem:[%s1 + $0xc0] sm:$0xf]
    %v72 = vld [vmem:[%s1 + $0xc4] sm:$0xf]
    %v73 = vld [vmem:[%s1 + $0xc8] sm:$0xf]
    %v74 = vld [vmem:[%s1 + $0xcc] sm:$0xf]
    %v75 = vld [vmem:[%s1 + $0xd0] sm:$0xf]
    %v76 = vld [vmem:[%s1 + $0xd4] sm:$0xf]
    %v77 = vld [vmem:[%s1 + $0xd8] sm:$0xf]
    %v78 = vld [vmem:[%s1 + $0xdc] sm:$0xf]
    %v79 = vld [vmem:[%s1 + $0xe0] sm:$0xf]
    %v80 = vld [vmem:[%s1 + $0xe4] sm:$0xf]
    %v81 = vld [vmem:[%s1 + $0xe8] sm:$0xf]
    %v82 = vld [vmem:[%s1 + $0xec] sm:$0xf]
    %v83 = vld [vmem:[%s1 + $0xf0] sm:$0xf]
    %v84 = vld [vmem:[%s1 + $0xf4] sm:$0xf]
    %v85 = vld [vmem:[%s1 + $0xf8] sm:$0xf]
    %v86 = vld [vmem:[%s1 + $0xfc] sm:$0xf]
    %v87 = vld [vmem:[%s2] sm:$0x1]
    %v89 = vlaneseq
    %v90 = vshrl.u32 %v89, 7
    %v91 = vsub.s32 0, %v90
    %v92 = vrot.slane %v87, %v91
    %v102 = vunpack.c.l.b16 %v15
    %v103 = vunpack.c.h.b16 %v15
    %v104 = vunpack.c.l.b16 %v16
    %v105 = vunpack.c.h.b16 %v16
    %v106 = vunpack.c.l.b16 %v17
    %v107 = vunpack.c.h.b16 %v17
    %v108 = vunpack.c.l.b16 %v18
    %v109 = vunpack.c.h.b16 %v18
    %v110 = vunpack.c.l.b16 %v19
    %v111 = vunpack.c.h.b16 %v19
    %v112 = vunpack.c.l.b16 %v20
    %v113 = vunpack.c.h.b16 %v20
    %v114 = vunpack.c.l.b16 %v21
    %v115 = vunpack.c.h.b16 %v21
    %v116 = vunpack.c.l.b16 %v22
    %v117 = vunpack.c.h.b16 %v22
    %v118 = vpack.c.b16 %v106, %v102
    %v119 = vpack.c.b16 %v107, %v103
    %v120 = vpack.c.b16 %v108, %v104
    %v121 = vpack.c.b16 %v109, %v105
    %v122 = vpack.c.b16 %v114, %v110
    %v123 = vpack.c.b16 %v115, %v111
    %v124 = vpack.c.b16 %v116, %v112
    %v125 = vpack.c.b16 %v117, %v113
    %v198 = vunpack.c.l.b16 %v23
    %v199 = vunpack.c.l.b16 %v24
    %v200 = vunpack.c.l.b16 %v25
    %v201 = vunpack.c.l.b16 %v26
    %v202 = vunpack.c.l.b16 %v27
    %v203 = vunpack.c.l.b16 %v28
    %v204 = vunpack.c.l.b16 %v29
    %v205 = vunpack.c.l.b16 %v30
    %v206 = vunpack.c.l.b16 %v31
    %v207 = vunpack.c.l.b16 %v32
    %v208 = vunpack.c.l.b16 %v33
    %v209 = vunpack.c.l.b16 %v34
    %v210 = vunpack.c.l.b16 %v35
    %v211 = vunpack.c.l.b16 %v36
    %v212 = vunpack.c.l.b16 %v37
    %v213 = vunpack.c.l.b16 %v38
    %v214 = vunpack.c.l.b16 %v39
    %v215 = vunpack.c.l.b16 %v40
    %v216 = vunpack.c.l.b16 %v41
    %v217 = vunpack.c.l.b16 %v42
    %v218 = vunpack.c.l.b16 %v43
    %v219 = vunpack.c.l.b16 %v44
    %v220 = vunpack.c.l.b16 %v45
    %v221 = vunpack.c.l.b16 %v46
    %v222 = vunpack.c.l.b16 %v47
    %v223 = vunpack.c.l.b16 %v48
    %v224 = vunpack.c.l.b16 %v49
    %v225 = vunpack.c.l.b16 %v50
    %v226 = vunpack.c.l.b16 %v51
    %v227 = vunpack.c.l.b16 %v52
    %v228 = vunpack.c.l.b16 %v53
    %v229 = vunpack.c.l.b16 %v54
    %v230 = vunpack.c.l.b16 %v55
    %v231 = vunpack.c.l.b16 %v56
    %v232 = vunpack.c.l.b16 %v57
    %v233 = vunpack.c.l.b16 %v58
    %v234 = vunpack.c.l.b16 %v59
    %v235 = vunpack.c.l.b16 %v60
    %v236 = vunpack.c.l.b16 %v61
    %v237 = vunpack.c.l.b16 %v62
    %v238 = vunpack.c.l.b16 %v63
    %v239 = vunpack.c.l.b16 %v64
    %v240 = vunpack.c.l.b16 %v65
    %v241 = vunpack.c.l.b16 %v66
    %v242 = vunpack.c.l.b16 %v67
    %v243 = vunpack.c.l.b16 %v68
    %v244 = vunpack.c.l.b16 %v69
    %v245 = vunpack.c.l.b16 %v70
    %v246 = vunpack.c.l.b16 %v71
    %v247 = vunpack.c.l.b16 %v72
    %v248 = vunpack.c.l.b16 %v73
    %v249 = vunpack.c.l.b16 %v74
    %v250 = vunpack.c.l.b16 %v75
    %v251 = vunpack.c.l.b16 %v76
    %v252 = vunpack.c.l.b16 %v77
    %v253 = vunpack.c.l.b16 %v78
    %v254 = vunpack.c.l.b16 %v79
    %v255 = vunpack.c.l.b16 %v80
    %v256 = vunpack.c.l.b16 %v81
    %v257 = vunpack.c.l.b16 %v82
    %v258 = vunpack.c.l.b16 %v83
    %v259 = vunpack.c.l.b16 %v84
    %v260 = vunpack.c.l.b16 %v85
    %v261 = vunpack.c.l.b16 %v86
    %v262 = vpack.c.b16 %v199, %v198
    %v263 = vpack.c.b16 %v201, %v200
    %v264 = vpack.c.b16 %v203, %v202
    %v265 = vpack.c.b16 %v205, %v204
    %v266 = vpack.c.b16 %v207, %v206
    %v267 = vpack.c.b16 %v209, %v208
    %v268 = vpack.c.b16 %v211, %v210
    %v269 = vpack.c.b16 %v213, %v212
    %v270 = vpack.c.b16 %v215, %v214
    %v271 = vpack.c.b16 %v217, %v216
    %v272 = vpack.c.b16 %v219, %v218
    %v273 = vpack.c.b16 %v221, %v220
    %v274 = vpack.c.b16 %v223, %v222
    %v275 = vpack.c.b16 %v225, %v224
    %v276 = vpack.c.b16 %v227, %v226
    %v277 = vpack.c.b16 %v229, %v228
    %v278 = vpack.c.b16 %v231, %v230
    %v279 = vpack.c.b16 %v233, %v232
    %v280 = vpack.c.b16 %v235, %v234
    %v281 = vpack.c.b16 %v237, %v236
    %v282 = vpack.c.b16 %v239, %v238
    %v283 = vpack.c.b16 %v241, %v240
    %v284 = vpack.c.b16 %v243, %v242
    %v285 = vpack.c.b16 %v245, %v244
    %v286 = vpack.c.b16 %v247, %v246
    %v287 = vpack.c.b16 %v249, %v248
    %v288 = vpack.c.b16 %v251, %v250
    %v289 = vpack.c.b16 %v253, %v252
    %v290 = vpack.c.b16 %v255, %v254
    %v291 = vpack.c.b16 %v257, %v256
    %v292 = vpack.c.b16 %v259, %v258
    %v293 = vpack.c.b16 %v261, %v260
    %326 = vmatprep.subr.bf16.mxu0 0
    %327 = vmatpush1.bf16.msra.mxu0 %v262
    %328 = vmatprep.subr.bf16.mxu0 0
    %329 = vmatpush1.bf16.msra.mxu0 %v263
    %330 = vmatprep.subr.bf16.mxu0 0
    %331 = vmatpush1.bf16.msra.mxu0 %v264
    %332 = vmatprep.subr.bf16.mxu0 0
    %333 = vmatpush1.bf16.msra.mxu0 %v265
    %334 = vmatprep.subr.bf16.mxu0 0
    %335 = vmatpush1.bf16.msra.mxu0 %v266
    %336 = vmatprep.subr.bf16.mxu0 0
    %337 = vmatpush1.bf16.msra.mxu0 %v267
    %338 = vmatprep.subr.bf16.mxu0 0
    %339 = vmatpush1.bf16.msra.mxu0 %v268
    %340 = vmatprep.subr.bf16.mxu0 0
    %341 = vmatpush1.bf16.msra.mxu0 %v269
    %342 = vmatprep.subr.bf16.mxu0 0
    %343 = vmatpush1.bf16.msra.mxu0 %v270
    %344 = vmatprep.subr.bf16.mxu0 0
    %345 = vmatpush1.bf16.msra.mxu0 %v271
    %346 = vmatprep.subr.bf16.mxu0 0
    %347 = vmatpush1.bf16.msra.mxu0 %v272
    %348 = vmatprep.subr.bf16.mxu0 0
    %349 = vmatpush1.bf16.msra.mxu0 %v273
    %350 = vmatprep.subr.bf16.mxu0 0
    %351 = vmatpush1.bf16.msra.mxu0 %v274
    %352 = vmatprep.subr.bf16.mxu0 0
    %353 = vmatpush1.bf16.msra.mxu0 %v275
    %354 = vmatprep.subr.bf16.mxu0 0
    %355 = vmatpush1.bf16.msra.mxu0 %v276
    %356 = vmatprep.subr.bf16.mxu0 0
    %357 = vmatpush1.bf16.msra.mxu0 %v277
    %358 = vmatprep.mubr.bf16.mxu0 %v119
    %359 = vmatmul.mubr.bf16.gmra.mrb[0].mxu0 %v118
    %v360 = vpop.f32.mrb[0].mxu0
    %v361 = vadd.f32 %v92, %v360
    %v362 = vpop.f32.mrb[0].mxu0
    %v363 = vpop.f32.mrb[0].mxu0
    %v364 = vadd.f32 %v92, %v363
    %v365 = vpop.f32.mrb[0].mxu0
    %366 = vmatprep.mubr.bf16.mxu0 %v123
    %367 = vmatmul.mubr.bf16.gmra.mrb[0].mxu0 %v122
    %v368 = vpop.f32.mrb[0].mxu0
    %v369 = vadd.f32 %v92, %v368
    %v370 = vpop.f32.mrb[0].mxu0
    %v371 = vpop.f32.mrb[0].mxu0
    %v372 = vadd.f32 %v92, %v371
    %v373 = vpop.f32.mrb[0].mxu0
    %374 = vdwg.mxu0
    %375 = vmatprep.subr.bf16.mxu0 0
    %376 = vmatpush1.bf16.msra.mxu0 %v278
    %377 = vmatprep.subr.bf16.mxu0 0
    %378 = vmatpush1.bf16.msra.mxu0 %v279
    %379 = vmatprep.subr.bf16.mxu0 0
    %380 = vmatpush1.bf16.msra.mxu0 %v280
    %381 = vmatprep.subr.bf16.mxu0 0
    %382 = vmatpush1.bf16.msra.mxu0 %v281
    %383 = vmatprep.subr.bf16.mxu0 0
    %384 = vmatpush1.bf16.msra.mxu0 %v282
    %385 = vmatprep.subr.bf16.mxu0 0
    %386 = vmatpush1.bf16.msra.mxu0 %v283
    %387 = vmatprep.subr.bf16.mxu0 0
    %388 = vmatpush1.bf16.msra.mxu0 %v284
    %389 = vmatprep.subr.bf16.mxu0 0
    %390 = vmatpush1.bf16.msra.mxu0 %v285
    %391 = vmatprep.subr.bf16.mxu0 0
    %392 = vmatpush1.bf16.msra.mxu0 %v286
    %393 = vmatprep.subr.bf16.mxu0 0
    %394 = vmatpush1.bf16.msra.mxu0 %v287
    %395 = vmatprep.subr.bf16.mxu0 0
    %396 = vmatpush1.bf16.msra.mxu0 %v288
    %397 = vmatprep.subr.bf16.mxu0 0
    %398 = vmatpush1.bf16.msra.mxu0 %v289
    %399 = vmatprep.subr.bf16.mxu0 0
    %400 = vmatpush1.bf16.msra.mxu0 %v290
    %401 = vmatprep.subr.bf16.mxu0 0
    %402 = vmatpush1.bf16.msra.mxu0 %v291
    %403 = vmatprep.subr.bf16.mxu0 0
    %404 = vmatpush1.bf16.msra.mxu0 %v292
    %405 = vmatprep.subr.bf16.mxu0 0
    %406 = vmatpush1.bf16.msra.mxu0 %v293
    %407 = vmatprep.mubr.bf16.mxu0 %v121
    %408 = vmatmul.mubr.bf16.gmra.mrb[0].mxu0 %v120
    %v409 = vpop.f32.mrb[0].mxu0
    %v410 = vadd.f32 %v361, %v409
    %v411 = vpop.f32.mrb[0].mxu0
    %v412 = vpop.f32.mrb[0].mxu0
    %v413 = vadd.f32 %v364, %v412
    %v414 = vpop.f32.mrb[0].mxu0
    %415 = vmatprep.mubr.bf16.mxu0 %v125
    %416 = vmatmul.mubr.bf16.gmra.mrb[0].mxu0 %v124
    %v417 = vpop.f32.mrb[0].mxu0
    %v418 = vadd.f32 %v369, %v417
    %v419 = vpop.f32.mrb[0].mxu0
    %v420 = vpop.f32.mrb[0].mxu0
    %v421 = vadd.f32 %v372, %v420
    %v422 = vpop.f32.mrb[0].mxu0
    %423 = vdwg.mxu0
    %v424 = vmax.f32 %v410, 0.0
    %v425 = vmax.f32 %v413, 0.0
    %v426 = vmax.f32 %v418, 0.0
    %v427 = vmax.f32 %v421, 0.0
    %428 = vst [vmem:[#allocation2] sm:$0xff] %v424
    %429 = vst [vmem:[#allocation2 + $0x8] sm:$0xff] %v425
    %430 = vst [vmem:[#allocation2 + $0x10] sm:$0xff] %v426
    %431 = vst [vmem:[#allocation2 + $0x18] sm:$0xff] %v427
    // Predicated region
    $region14: #{conv_block_forward.4} parent=1 // pred_check
      _
    $region15: #{conv_block_forward.4} parent=1 // pred_check_branch
      %433 = sbr.rel (0) target = $region17
    $region16: #{conv_block_forward.4} parent=1 // pred_region
      // Predicated region
      $region18: #{conv_block_forward.4} parent=16 // pred_check
        _
      $region19: #{conv_block_forward.4} parent=16 // pred_check_branch
        %435 = sbr.rel (0) target = $region21
      $region20: #{conv_block_forward.4} parent=16 // pred_region
        // Predicated region
        $region22: #{conv_block_forward.4} parent=20 // pred_check
          _
        $region23: #{conv_block_forward.4} parent=20 // pred_check_branch
          %437 = sbr.rel (0) target = $region25
        $region24: #{conv_block_forward.4} parent=20 // pred_region
          // Predicated region
          $region37: #{conv_block_forward.4} parent=24 // pred_check
            _
          $region38: #{conv_block_forward.4} parent=24 // pred_check_branch
            %456 = sbr.rel (0) target = $region40
          $region39: #{conv_block_forward.4} parent=24 // pred_region
            loop: start=0, step=1, limit=1
            $region41: #{conv_block_forward.4} parent=39 // loop_pre_header
              _
            $region42: #{conv_block_forward.4} parent=39 // loop_header
              %s458 = sphi 0, %s462
              %p459 = scmp.ge.s32.totalorder %s458, 1
              %s463 = sphi [#allocation2], [#allocation2]
              %s464 = sphi %s3, %s3
            $region43: #{conv_block_forward.4} parent=39 // loop_header_branch
              %461 = sbr.rel (%p459) target = $region47
            $region44: #{conv_block_forward.4} parent=39 // loop_body
              %v465 = vld [vmem:[%s463] sm:$0xff]
              %466 = vst [vmem:[%s464] sm:$0xff] %v465
              %v467 = vld [vmem:[%s463 + $0x8] sm:$0xff]
              %468 = vst [vmem:[%s464 + $0x8] sm:$0xff] %v467
              %v469 = vld [vmem:[%s463 + $0x10] sm:$0xff]
              %470 = vst [vmem:[%s464 + $0x10] sm:$0xff] %v469
            $region45: #{conv_block_forward.4} parent=39 // loop_footer
              %s462 = sadd.s32 1, %s458
            $region46: #{conv_block_forward.4} parent=39 // loop_footer_branch
              %457 = sbr.rel target = $region42
            $region47: #{conv_block_forward.4} parent=39 // loop_exit
              _
          $region40: #{conv_block_forward.4} parent=24 // pred_fallthru
            _
          // Predicated region
          $region48: #{conv_block_forward.4} parent=24 // pred_check
            _
          $region49: #{conv_block_forward.4} parent=24 // pred_check_branch
            %472 = sbr.rel target = $region51
          $region50: #{conv_block_forward.4} parent=24 // pred_region
            _
          $region51: #{conv_block_forward.4} parent=24 // pred_fallthru
            _
        $region25: #{conv_block_forward.4} parent=20 // pred_fallthru
          _
        // Predicated region
        $region26: #{conv_block_forward.4} parent=20 // pred_check
          _
        $region27: #{conv_block_forward.4} parent=20 // pred_check_branch
          %439 = sbr.rel target = $region29
        $region28: #{conv_block_forward.4} parent=20 // pred_region
          loop: start=0, step=1, limit=1
          $region30: #{conv_block_forward.4} parent=28 // loop_pre_header
            _
          $region31: #{conv_block_forward.4} parent=28 // loop_header
            %s442 = sphi 0, %s446
            %p443 = scmp.ge.s32.totalorder %s442, 1
            %s447 = sphi [#allocation2], [#allocation2]
            %s448 = sphi %s3, %s3
          $region32: #{conv_block_forward.4} parent=28 // loop_header_branch
            %445 = sbr.rel (%p443) target = $region36
          $region33: #{conv_block_forward.4} parent=28 // loop_body
            %v449 = vld [vmem:[%s447] sm:$0xff]
            %450 = vst [vmem:[%s448] sm:$0xff] %v449
            %v451 = vld [vmem:[%s447 + $0x8] sm:$0xff]
            %452 = vst [vmem:[%s448 + $0x8] sm:$0xff] %v451
            %v453 = vld [vmem:[%s447 + $0x10] sm:$0xff]
            %454 = vst [vmem:[%s448 + $0x10] sm:$0xff] %v453
          $region34: #{conv_block_forward.4} parent=28 // loop_footer
            %s446 = sadd.s32 1, %s442
          $region35: #{conv_block_forward.4} parent=28 // loop_footer_branch
            %441 = sbr.rel target = $region31
          $region36: #{conv_block_forward.4} parent=28 // loop_exit
            _
        $region29: #{conv_block_forward.4} parent=20 // pred_fallthru
          _
      $region21: #{conv_block_forward.4} parent=16 // pred_fallthru
        _
      %473 = vnop
    $region17: #{conv_block_forward.4} parent=1 // pred_fallthru
      _
    // Predicated region
    $region52: #{conv_block_forward.4} parent=1 // pred_check
      _
    $region53: #{conv_block_forward.4} parent=1 // pred_check_branch
      %475 = sbr.rel (0) target = $region55
    $region54: #{conv_block_forward.4} parent=1 // pred_region
      _
    $region55: #{conv_block_forward.4} parent=1 // pred_fallthru
      _

// kernel: conv_block_forward.5
$region0: #{conv_block_forward.5}
  #allocation0 [shape = 'u32[]', space=smem, size = 0x4, offset = 0x4, fixed_abs, tag = 'smem constant byte address 0x4 - core index']
  #allocation1 [shape = 'u32[144,128]{1,0:T(1,128)}', space=vmem, size = 0x12000, scoped, tag = 'internal scratch']
  %s0 = inlined_call_operand.vmem [shape: bf16[2,640], index: 0, kind: input, shape index: {}]
  %s1 = inlined_call_operand.vmem [shape: bf16[640,128], index: 1, kind: input, shape index: {}]
  %s2 = inlined_call_operand.vmem [shape: f32[1,128], index: 2, kind: input, shape index: {}]
  %s3 = inlined_call_operand.vmem [shape: f32[2,128], index: 3, kind: output, shape index: {}]
  %s4 = sld [smem:[#allocation0]]
  $region52: #{conv_block_forward.5} parent=0
    _
  %s6 = ssub.s32 1, %s4
  %s7 = scalar_select 0, %s6, %s4
  $region1: #{conv_block_forward.5} parent=0
    #allocation2 [shape = 'u8[8192]{0}', space=vmem, size = 0x2000, scoped, tag = 'output window, operand 0, single buffered']
    // Predicated region
    $region2: #{conv_block_forward.5} parent=1 // pred_check
      _
    $region3: #{conv_block_forward.5} parent=1 // pred_check_branch
      %9 = sbr.rel (0) target = $region5
    $region4: #{conv_block_forward.5} parent=1 // pred_region
      _
    $region5: #{conv_block_forward.5} parent=1 // pred_fallthru
      _
    // Predicated region
    $region6: #{conv_block_forward.5} parent=1 // pred_check
      _
    $region7: #{conv_block_forward.5} parent=1 // pred_check_branch
      %11 = sbr.rel (0) target = $region9
    $region8: #{conv_block_forward.5} parent=1 // pred_region
      _
    $region9: #{conv_block_forward.5} parent=1 // pred_fallthru
      _
    // Predicated region
    $region10: #{conv_block_forward.5} parent=1 // pred_check
      _
    $region11: #{conv_block_forward.5} parent=1 // pred_check_branch
      %13 = sbr.rel (0) target = $region13
    $region12: #{conv_block_forward.5} parent=1 // pred_region
      _
    $region13: #{conv_block_forward.5} parent=1 // pred_fallthru
      _
    %v15 = vld [vmem:[%s0] sm:$0x1f]
    %v16 = vld [vmem:[%s0 + $0x5] sm:$0x1f]
    %v17 = vld [vmem:[%s0 + $0xa] sm:$0x1f]
    %v18 = vld [vmem:[%s0 + $0xf] sm:$0x1f]
    %v19 = vld [vmem:[%s0 + $0x14] sm:$0x1f]
    %v20 = vld [vmem:[%s0 + $0x19] sm:$0x1f]
    %v21 = vld [vmem:[%s0 + $0x1e] sm:$0x1f]
    %v22 = vld [vmem:[%s0 + $0x23] sm:$0x1f]
    %v23 = vld [vmem:[%s1] sm:$0xf]
    %v24 = vld [vmem:[%s1 + $0x4] sm:$0xf]
    %v25 = vld [vmem:[%s1 + $0x8] sm:$0xf]
    %v26 = vld [vmem:[%s1 + $0xc] sm:$0xf]
    %v27 = vld [vmem:[%s1 + $0x10] sm:$0xf]
    %v28 = vld [vmem:[%s1 + $0x14] sm:$0xf]
    %v29 = vld [vmem:[%s1 + $0x18] sm:$0xf]
    %v30 = vld [vmem:[%s1 + $0x1c] sm:$0xf]
    %v31 = vld [vmem:[%s1 + $0x20] sm:$0xf]
    %v32 = vld [vmem:[%s1 + $0x24] sm:$0xf]
    %v33 = vld [vmem:[%s1 + $0x28] sm:$0xf]
    %v34 = vld [vmem:[%s1 + $0x2c] sm:$0xf]
    %v35 = vld [vmem:[%s1 + $0x30] sm:$0xf]
    %v36 = vld [vmem:[%s1 + $0x34] sm:$0xf]
    %v37 = vld [vmem:[%s1 + $0x38] sm:$0xf]
    %v38 = vld [vmem:[%s1 + $0x3c] sm:$0xf]
    %v39 = vld [vmem:[%s1 + $0x40] sm:$0xf]
    %v40 = vld [vmem:[%s1 + $0x44] sm:$0xf]
    %v41 = vld [vmem:[%s1 + $0x48] sm:$0xf]
    %v42 = vld [vmem:[%s1 + $0x4c] sm:$0xf]
    %v43 = vld [vmem:[%s1 + $0x50] sm:$0xf]
    %v44 = vld [vmem:[%s1 + $0x54] sm:$0xf]
    %v45 = vld [vmem:[%s1 + $0x58] sm:$0xf]
    %v46 = vld [vmem:[%s1 + $0x5c] sm:$0xf]
    %v47 = vld [vmem:[%s1 + $0x60] sm:$0xf]
    %v48 = vld [vmem:[%s1 + $0x64] sm:$0xf]
    %v49 = vld [vmem:[%s1 + $0x68] sm:$0xf]
    %v50 = vld [vmem:[%s1 + $0x6c] sm:$0xf]
    %v51 = vld [vmem:[%s1 + $0x70] sm:$0xf]
    %v52 = vld [vmem:[%s1 + $0x74] sm:$0xf]
    %v53 = vld [vmem:[%s1 + $0x78] sm:$0xf]
    %v54 = vld [vmem:[%s1 + $0x7c] sm:$0xf]
    %v55 = vld [vmem:[%s1 + $0x80] sm:$0xf]
    %v56 = vld [vmem:[%s1 + $0x84] sm:$0xf]
    %v57 = vld [vmem:[%s1 + $0x88] sm:$0xf]
    %v58 = vld [vmem:[%s1 + $0x8c] sm:$0xf]
    %v59 = vld [vmem:[%s1 + $0x90] sm:$0xf]
    %v60 = vld [vmem:[%s1 + $0x94] sm:$0xf]
    %v61 = vld [vmem:[%s1 + $0x98] sm:$0xf]
    %v62 = vld [vmem:[%s1 + $0x9c] sm:$0xf]
    %v63 = vld [vmem:[%s1 + $0xa0] sm:$0xf]
    %v64 = vld [vmem:[%s1 + $0xa4] sm:$0xf]
    %v65 = vld [vmem:[%s1 + $0xa8] sm:$0xf]
    %v66 = vld [vmem:[%s1 + $0xac] sm:$0xf]
    %v67 = vld [vmem:[%s1 + $0xb0] sm:$0xf]
    %v68 = vld [vmem:[%s1 + $0xb4] sm:$0xf]
    %v69 = vld [vmem:[%s1 + $0xb8] sm:$0xf]
    %v70 = vld [vmem:[%s1 + $0xbc] sm:$0xf]
    %v71 = vld [vmem:[%s1 + $0xc0] sm:$0xf]
    %v72 = vld [vmem:[%s1 + $0xc4] sm:$0xf]
    %v73 = vld [vmem:[%s1 + $0xc8] sm:$0xf]
    %v74 = vld [vmem:[%s1 + $0xcc] sm:$0xf]
    %v75 = vld [vmem:[%s1 + $0xd0] sm:$0xf]
    %v76 = vld [vmem:[%s1 + $0xd4] sm:$0xf]
    %v77 = vld [vmem:[%s1 + $0xd8] sm:$0xf]
    %v78 = vld [vmem:[%s1 + $0xdc] sm:$0xf]
    %v79 = vld [vmem:[%s1 + $0xe0] sm:$0xf]
    %v80 = vld [vmem:[%s1 + $0xe4] sm:$0xf]
    %v81 = vld [vmem:[%s1 + $0xe8] sm:$0xf]
    %v82 = vld [vmem:[%s1 + $0xec] sm:$0xf]
    %v83 = vld [vmem:[%s1 + $0xf0] sm:$0xf]
    %v84 = vld [vmem:[%s1 + $0xf4] sm:$0xf]
    %v85 = vld [vmem:[%s1 + $0xf8] sm:$0xf]
    %v86 = vld [vmem:[%s1 + $0xfc] sm:$0xf]
    %v87 = vld [vmem:[%s1 + $0x100] sm:$0xf]
    %v88 = vld [vmem:[%s1 + $0x104] sm:$0xf]
    %v89 = vld [vmem:[%s1 + $0x108] sm:$0xf]
    %v90 = vld [vmem:[%s1 + $0x10c] sm:$0xf]
    %v91 = vld [vmem:[%s1 + $0x110] sm:$0xf]
    %v92 = vld [vmem:[%s1 + $0x114] sm:$0xf]
    %v93 = vld [vmem:[%s1 + $0x118] sm:$0xf]
    %v94 = vld [vmem:[%s1 + $0x11c] sm:$0xf]
    %v95 = vld [vmem:[%s1 + $0x120] sm:$0xf]
    %v96 = vld [vmem:[%s1 + $0x124] sm:$0xf]
    %v97 = vld [vmem:[%s1 + $0x128] sm:$0xf]
    %v98 = vld [vmem:[%s1 + $0x12c] sm:$0xf]
    %v99 = vld [vmem:[%s1 + $0x130] sm:$0xf]
    %v100 = vld [vmem:[%s1 + $0x134] sm:$0xf]
    %v101 = vld [vmem:[%s1 + $0x138] sm:$0xf]
    %v102 = vld [vmem:[%s1 + $0x13c] sm:$0xf]
    %v103 = vld [vmem:[%s2] sm:$0x1]
    %v105 = vlaneseq
    %v106 = vshrl.u32 %v105, 7
    %v107 = vsub.s32 0, %v106
    %v108 = vrot.slane %v103, %v107
    %v118 = vcombine.low %v15, %v16
    %v119 = vcombine.high %v15, %v16
    %v120 = vcombine.low %v17, %v18
    %v121 = vcombine.high %v17, %v18
    %v122 = vcombine.low %v19, %v20
    %v123 = vcombine.high %v19, %v20
    %v124 = vcombine.low %v21, %v22
    %v125 = vcombine.high %v21, %v22
    %v127 = vunpack.c.l.s4 1966171168
    %v128 = vunpack.c.0.s8 %v127
    %v129 = vlaneseq
    %v130 = vshrl.u32 %v129, 7
    %v131 = vsub.s32 %v128, %v130
    %v132 = vrot.slane %v118, %v131
    %v134 = vunpack.c.l.s4 1966171168
    %v135 = vunpack.c.0.s8 %v134
    %v136 = vlaneseq
    %v137 = vshrl.u32 %v136, 7
    %v138 = vsub.s32 %v135, %v137
    %v139 = vrot.slane %v119, %v138
    %v141 = vunpack.c.l.s4 1966171168
    %v142 = vunpack.c.0.s8 %v141
    %v143 = vlaneseq
    %v144 = vshrl.u32 %v143, 7
    %v145 = vsub.s32 %v142, %v144
    %v146 = vrot.slane %v120, %v145
    %v148 = vunpack.c.l.s4 1966171168
    %v149 = vunpack.c.0.s8 %v148
    %v150 = vlaneseq
    %v151 = vshrl.u32 %v150, 7
    %v152 = vsub.s32 %v149, %v151
    %v153 = vrot.slane %v121, %v152
    %v155 = vunpack.c.l.s4 1966171168
    %v156 = vunpack.c.0.s8 %v155
    %v157 = vlaneseq
    %v158 = vshrl.u32 %v157, 7
    %v159 = vsub.s32 %v156, %v158
    %v160 = vrot.slane %v122, %v159
    %v162 = vunpack.c.l.s4 1966171168
    %v163 = vunpack.c.0.s8 %v162
    %v164 = vlaneseq
    %v165 = vshrl.u32 %v164, 7
    %v166 = vsub.s32 %v163, %v165
    %v167 = vrot.slane %v123, %v166
    %v169 = vunpack.c.l.s4 1966171168
    %v170 = vunpack.c.0.s8 %v169
    %v171 = vlaneseq
    %v172 = vshrl.u32 %v171, 7
    %v173 = vsub.s32 %v170, %v172
    %v174 = vrot.slane %v124, %v173
    %v176 = vunpack.c.l.s4 1966171168
    %v177 = vunpack.c.0.s8 %v176
    %v178 = vlaneseq
    %v179 = vshrl.u32 %v178, 7
    %v180 = vsub.s32 %v177, %v179
    %v181 = vrot.slane %v125, %v180
    %v182 = vcombine.low %v132, %v146
    %v183 = vcombine.high %v132, %v146
    %v184 = vcombine.low %v139, %v153
    %v185 = vcombine.low %v160, %v174
    %v186 = vcombine.high %v160, %v174
    %v187 = vcombine.low %v167, %v181
    %v189 = vunpack.c.l.s4 1966171168
    %v190 = vunpack.c.0.s8 %v189
    %v191 = vlaneseq
    %v192 = vshrl.u32 %v191, 7
    %v193 = vsub.s32 %v190, %v192
    %v194 = vrot.slane %v182, %v193
    %v196 = vunpack.c.l.s4 1966171168
    %v197 = vunpack.c.0.s8 %v196
    %v198 = vlaneseq
    %v199 = vshrl.u32 %v198, 7
    %v200 = vsub.s32 %v197, %v199
    %v201 = vrot.slane %v184, %v200
    %v203 = vunpack.c.l.s4 1966171168
    %v204 = vunpack.c.0.s8 %v203
    %v205 = vlaneseq
    %v206 = vshrl.u32 %v205, 7
    %v207 = vsub.s32 %v204, %v206
    %v208 = vrot.slane %v183, %v207
    %v210 = vunpack.c.l.s4 1966171168
    %v211 = vunpack.c.0.s8 %v210
    %v212 = vlaneseq
    %v213 = vshrl.u32 %v212, 7
    %v214 = vsub.s32 %v211, %v213
    %v215 = vrot.slane %v185, %v214
    %v217 = vunpack.c.l.s4 1966171168
    %v218 = vunpack.c.0.s8 %v217
    %v219 = vlaneseq
    %v220 = vshrl.u32 %v219, 7
    %v221 = vsub.s32 %v218, %v220
    %v222 = vrot.slane %v187, %v221
    %v224 = vunpack.c.l.s4 1966171168
    %v225 = vunpack.c.0.s8 %v224
    %v226 = vlaneseq
    %v227 = vshrl.u32 %v226, 7
    %v228 = vsub.s32 %v225, %v227
    %v229 = vrot.slane %v186, %v228
    %v230 = vcombine.low %v194, %v215
    %v231 = vcombine.high %v194, %v215
    %v232 = vcombine.low %v201, %v222
    %v233 = vcombine.low %v208, %v229
    %v234 = vcombine.high %v208, %v229
    %v320 = vunpack.c.l.b16 %v23
    %v321 = vunpack.c.l.b16 %v24
    %v322 = vunpack.c.l.b16 %v25
    %v323 = vunpack.c.l.b16 %v26
    %v324 = vunpack.c.l.b16 %v27
    %v325 = vunpack.c.l.b16 %v28
    %v326 = vunpack.c.l.b16 %v29
    %v327 = vunpack.c.l.b16 %v30
    %v328 = vunpack.c.l.b16 %v31
    %v329 = vunpack.c.l.b16 %v32
    %v330 = vunpack.c.l.b16 %v33
    %v331 = vunpack.c.l.b16 %v34
    %v332 = vunpack.c.l.b16 %v35
    %v333 = vunpack.c.l.b16 %v36
    %v334 = vunpack.c.l.b16 %v37
    %v335 = vunpack.c.l.b16 %v38
    %v336 = vunpack.c.l.b16 %v39
    %v337 = vunpack.c.l.b16 %v40
    %v338 = vunpack.c.l.b16 %v41
    %v339 = vunpack.c.l.b16 %v42
    %v340 = vunpack.c.l.b16 %v43
    %v341 = vunpack.c.l.b16 %v44
    %v342 = vunpack.c.l.b16 %v45
    %v343 = vunpack.c.l.b16 %v46
    %v344 = vunpack.c.l.b16 %v47
    %v345 = vunpack.c.l.b16 %v48
    %v346 = vunpack.c.l.b16 %v49
    %v347 = vunpack.c.l.b16 %v50
    %v348 = vunpack.c.l.b16 %v51
    %v349 = vunpack.c.l.b16 %v52
    %v350 = vunpack.c.l.b16 %v53
    %v351 = vunpack.c.l.b16 %v54
    %v352 = vunpack.c.l.b16 %v55
    %v353 = vunpack.c.l.b16 %v56
    %v354 = vunpack.c.l.b16 %v57
    %v355 = vunpack.c.l.b16 %v58
    %v356 = vunpack.c.l.b16 %v59
    %v357 = vunpack.c.l.b16 %v60
    %v358 = vunpack.c.l.b16 %v61
    %v359 = vunpack.c.l.b16 %v62
    %v360 = vunpack.c.l.b16 %v63
    %v361 = vunpack.c.l.b16 %v64
    %v362 = vunpack.c.l.b16 %v65
    %v363 = vunpack.c.l.b16 %v66
    %v364 = vunpack.c.l.b16 %v67
    %v365 = vunpack.c.l.b16 %v68
    %v366 = vunpack.c.l.b16 %v69
    %v367 = vunpack.c.l.b16 %v70
    %v368 = vunpack.c.l.b16 %v71
    %v369 = vunpack.c.l.b16 %v72
    %v370 = vunpack.c.l.b16 %v73
    %v371 = vunpack.c.l.b16 %v74
    %v372 = vunpack.c.l.b16 %v75
    %v373 = vunpack.c.l.b16 %v76
    %v374 = vunpack.c.l.b16 %v77
    %v375 = vunpack.c.l.b16 %v78
    %v376 = vunpack.c.l.b16 %v79
    %v377 = vunpack.c.l.b16 %v80
    %v378 = vunpack.c.l.b16 %v81
    %v379 = vunpack.c.l.b16 %v82
    %v380 = vunpack.c.l.b16 %v83
    %v381 = vunpack.c.l.b16 %v84
    %v382 = vunpack.c.l.b16 %v85
    %v383 = vunpack.c.l.b16 %v86
    %v384 = vunpack.c.l.b16 %v87
    %v385 = vunpack.c.l.b16 %v88
    %v386 = vunpack.c.l.b16 %v89
    %v387 = vunpack.c.l.b16 %v90
    %v388 = vunpack.c.l.b16 %v91
    %v389 = vunpack.c.l.b16 %v92
    %v390 = vunpack.c.l.b16 %v93
    %v391 = vunpack.c.l.b16 %v94
    %v392 = vunpack.c.l.b16 %v95
    %v393 = vunpack.c.l.b16 %v96
    %v394 = vunpack.c.l.b16 %v97
    %v395 = vunpack.c.l.b16 %v98
    %v396 = vunpack.c.l.b16 %v99
    %v397 = vunpack.c.l.b16 %v100
    %v398 = vunpack.c.l.b16 %v101
    %v399 = vunpack.c.l.b16 %v102
    %v400 = vpack.c.b16 %v321, %v320
    %v401 = vpack.c.b16 %v323, %v322
    %v402 = vpack.c.b16 %v325, %v324
    %v403 = vpack.c.b16 %v327, %v326
    %v404 = vpack.c.b16 %v329, %v328
    %v405 = vpack.c.b16 %v331, %v330
    %v406 = vpack.c.b16 %v333, %v332
    %v407 = vpack.c.b16 %v335, %v334
    %v408 = vpack.c.b16 %v337, %v336
    %v409 = vpack.c.b16 %v339, %v338
    %v410 = vpack.c.b16 %v341, %v340
    %v411 = vpack.c.b16 %v343, %v342
    %v412 = vpack.c.b16 %v345, %v344
    %v413 = vpack.c.b16 %v347, %v346
    %v414 = vpack.c.b16 %v349, %v348
    %v415 = vpack.c.b16 %v351, %v350
    %v416 = vpack.c.b16 %v353, %v352
    %v417 = vpack.c.b16 %v355, %v354
    %v418 = vpack.c.b16 %v357, %v356
    %v419 = vpack.c.b16 %v359, %v358
    %v420 = vpack.c.b16 %v361, %v360
    %v421 = vpack.c.b16 %v363, %v362
    %v422 = vpack.c.b16 %v365, %v364
    %v423 = vpack.c.b16 %v367, %v366
    %v424 = vpack.c.b16 %v369, %v368
    %v425 = vpack.c.b16 %v371, %v370
    %v426 = vpack.c.b16 %v373, %v372
    %v427 = vpack.c.b16 %v375, %v374
    %v428 = vpack.c.b16 %v377, %v376
    %v429 = vpack.c.b16 %v379, %v378
    %v430 = vpack.c.b16 %v381, %v380
    %v431 = vpack.c.b16 %v383, %v382
    %v432 = vpack.c.b16 %v385, %v384
    %v433 = vpack.c.b16 %v387, %v386
    %v434 = vpack.c.b16 %v389, %v388
    %v435 = vpack.c.b16 %v391, %v390
    %v436 = vpack.c.b16 %v393, %v392
    %v437 = vpack.c.b16 %v395, %v394
    %v438 = vpack.c.b16 %v397, %v396
    %v439 = vpack.c.b16 %v399, %v398
    %480 = vmatprep.subr.bf16.mxu0 0
    %481 = vmatpush1.bf16.msra.mxu0 %v400
    %482 = vmatprep.subr.bf16.mxu0 0
    %483 = vmatpush1.bf16.msra.mxu0 %v401
    %484 = vmatprep.subr.bf16.mxu0 0
    %485 = vmatpush1.bf16.msra.mxu0 %v402
    %486 = vmatprep.subr.bf16.mxu0 0
    %487 = vmatpush1.bf16.msra.mxu0 %v403
    %488 = vmatprep.subr.bf16.mxu0 0
    %489 = vmatpush1.bf16.msra.mxu0 %v404
    %490 = vmatprep.subr.bf16.mxu0 0
    %491 = vmatpush1.bf16.msra.mxu0 %v405
    %492 = vmatprep.subr.bf16.mxu0 0
    %493 = vmatpush1.bf16.msra.mxu0 %v406
    %494 = vmatprep.subr.bf16.mxu0 0
    %495 = vmatpush1.bf16.msra.mxu0 %v407
    %496 = vmatprep.subr.bf16.mxu0 0
    %497 = vmatpush1.bf16.msra.mxu0 %v408
    %498 = vmatprep.subr.bf16.mxu0 0
    %499 = vmatpush1.bf16.msra.mxu0 %v409
    %500 = vmatprep.subr.bf16.mxu0 0
    %501 = vmatpush1.bf16.msra.mxu0 %v410
    %502 = vmatprep.subr.bf16.mxu0 0
    %503 = vmatpush1.bf16.msra.mxu0 %v411
    %504 = vmatprep.subr.bf16.mxu0 0
    %505 = vmatpush1.bf16.msra.mxu0 %v412
    %506 = vmatprep.subr.bf16.mxu0 0
    %507 = vmatpush1.bf16.msra.mxu0 %v413
    %508 = vmatprep.subr.bf16.mxu0 0
    %509 = vmatpush1.bf16.msra.mxu0 %v414
    %510 = vmatprep.subr.bf16.mxu0 0
    %511 = vmatpush1.bf16.msra.mxu0 %v415
    %512 = vmatprep.mubr.bf16.mxu0 %v233
    %513 = vmatmul.mubr.bf16.gmra.mrb[0].mxu0 %v230
    %v514 = vpop.f32.mrb[0].mxu0
    %v515 = vadd.f32 %v108, %v514
    %v516 = vpop.f32.mrb[0].mxu0
    %v517 = vpop.f32.mrb[0].mxu0
    %v518 = vadd.f32 %v108, %v517
    %v519 = vpop.f32.mrb[0].mxu0
    %520 = vdwg.mxu0
    %521 = vmatprep.subr.bf16.mxu0 0
    %522 = vmatpush1.bf16.msra.mxu0 %v416
    %523 = vmatprep.subr.bf16.mxu0 0
    %524 = vmatpush1.bf16.msra.mxu0 %v417
    %525 = vmatprep.subr.bf16.mxu0 0
    %526 = vmatpush1.bf16.msra.mxu0 %v418
    %527 = vmatprep.subr.bf16.mxu0 0
    %528 = vmatpush1.bf16.msra.mxu0 %v419
    %529 = vmatprep.subr.bf16.mxu0 0
    %530 = vmatpush1.bf16.msra.mxu0 %v420
    %531 = vmatprep.subr.bf16.mxu0 0
    %532 = vmatpush1.bf16.msra.mxu0 %v421
    %533 = vmatprep.subr.bf16.mxu0 0
    %534 = vmatpush1.bf16.msra.mxu0 %v422
    %535 = vmatprep.subr.bf16.mxu0 0
    %536 = vmatpush1.bf16.msra.mxu0 %v423
    %537 = vmatprep.subr.bf16.mxu0 0
    %538 = vmatpush1.bf16.msra.mxu0 %v424
    %539 = vmatprep.subr.bf16.mxu0 0
    %540 = vmatpush1.bf16.msra.mxu0 %v425
    %541 = vmatprep.subr.bf16.mxu0 0
    %542 = vmatpush1.bf16.msra.mxu0 %v426
    %543 = vmatprep.subr.bf16.mxu0 0
    %544 = vmatpush1.bf16.msra.mxu0 %v427
    %545 = vmatprep.subr.bf16.mxu0 0
    %546 = vmatpush1.bf16.msra.mxu0 %v428
    %547 = vmatprep.subr.bf16.mxu0 0
    %548 = vmatpush1.bf16.msra.mxu0 %v429
    %549 = vmatprep.subr.bf16.mxu0 0
    %550 = vmatpush1.bf16.msra.mxu0 %v430
    %551 = vmatprep.subr.bf16.mxu0 0
    %552 = vmatpush1.bf16.msra.mxu0 %v431
    %553 = vmatprep.mubr.bf16.mxu0 %v234
    %554 = vmatmul.mubr.bf16.gmra.mrb[0].mxu0 %v231
    %v555 = vpop.f32.mrb[0].mxu0
    %v556 = vadd.f32 %v515, %v555
    %v557 = vpop.f32.mrb[0].mxu0
    %v558 = vpop.f32.mrb[0].mxu0
    %v559 = vadd.f32 %v518, %v558
    %v560 = vpop.f32.mrb[0].mxu0
    %561 = vdwg.mxu0
    %562 = vmatprep.subr.bf16.mxu0 0
    %563 = vmatpush1.bf16.msra.mxu0 %v432
    %564 = vmatprep.subr.bf16.mxu0 0
    %565 = vmatpush1.bf16.msra.mxu0 %v433
    %566 = vmatprep.subr.bf16.mxu0 0
    %567 = vmatpush1.bf16.msra.mxu0 %v434
    %568 = vmatprep.subr.bf16.mxu0 0
    %569 = vmatpush1.bf16.msra.mxu0 %v435
    %570 = vmatprep.subr.bf16.mxu0 0
    %571 = vmatpush1.bf16.msra.mxu0 %v436
    %572 = vmatprep.subr.bf16.mxu0 0
    %573 = vmatpush1.bf16.msra.mxu0 %v437
    %574 = vmatprep.subr.bf16.mxu0 0
    %575 = vmatpush1.bf16.msra.mxu0 %v438
    %576 = vmatprep.subr.bf16.mxu0 0
    %577 = vmatpush1.bf16.msra.mxu0 %v439
    %578 = vmatprep.subr.bf16.mxu0 0
    %579 = vmatpush1.bf16.msra.mxu0 0
    %580 = vmatprep.subr.bf16.mxu0 0
    %581 = vmatpush1.bf16.msra.mxu0 0
    %582 = vmatprep.subr.bf16.mxu0 0
    %583 = vmatpush1.bf16.msra.mxu0 0
    %584 = vmatprep.subr.bf16.mxu0 0
    %585 = vmatpush1.bf16.msra.mxu0 0
    %586 = vmatprep.subr.bf16.mxu0 0
    %587 = vmatpush1.bf16.msra.mxu0 0
    %588 = vmatprep.subr.bf16.mxu0 0
    %589 = vmatpush1.bf16.msra.mxu0 0
    %590 = vmatprep.subr.bf16.mxu0 0
    %591 = vmatpush1.bf16.msra.mxu0 0
    %592 = vmatprep.subr.bf16.mxu0 0
    %593 = vmatpush1.bf16.msra.mxu0 0
    %594 = vmatprep.mubr.bf16.mxu0 0
    %595 = vmatmul.mubr.bf16.gmra.mrb[0].mxu0 %v232
    %v596 = vpop.f32.mrb[0].mxu0
    %v597 = vadd.f32 %v556, %v596
    %v598 = vpop.f32.mrb[0].mxu0
    %v599 = vpop.f32.mrb[0].mxu0
    %v600 = vadd.f32 %v559, %v599
    %v601 = vpop.f32.mrb[0].mxu0
    %602 = vdwg.mxu0
    %v603 = vmax.f32 %v597, 0.0
    %v604 = vmax.f32 %v600, 0.0
    %605 = vst [vmem:[#allocation2] sm:$0xff] %v603
    %606 = vst [vmem:[#allocation2 + $0x8] sm:$0xff] %v604
    // Predicated region
    $region14: #{conv_block_forward.5} parent=1 // pred_check
      _
    $region15: #{conv_block_forward.5} parent=1 // pred_check_branch
      %608 = sbr.rel (0) target = $region17
    $region16: #{conv_block_forward.5} parent=1 // pred_region
      // Predicated region
      $region18: #{conv_block_forward.5} parent=16 // pred_check
        _
      $region19: #{conv_block_forward.5} parent=16 // pred_check_branch
        %610 = sbr.rel (0) target = $region21
      $region20: #{conv_block_forward.5} parent=16 // pred_region
        // Predicated region
        $region22: #{conv_block_forward.5} parent=20 // pred_check
          _
        $region23: #{conv_block_forward.5} parent=20 // pred_check_branch
          %612 = sbr.rel target = $region25
        $region24: #{conv_block_forward.5} parent=20 // pred_region
          // Predicated region
          $region37: #{conv_block_forward.5} parent=24 // pred_check
            _
          $region38: #{conv_block_forward.5} parent=24 // pred_check_branch
            %627 = sbr.rel (0) target = $region40
          $region39: #{conv_block_forward.5} parent=24 // pred_region
            loop: start=0, step=1, limit=1
            $region41: #{conv_block_forward.5} parent=39 // loop_pre_header
              _
            $region42: #{conv_block_forward.5} parent=39 // loop_header
              %s630 = sphi 0, %s634
              %p631 = scmp.ge.s32.totalorder %s630, 1
              %s635 = sphi [#allocation2], [#allocation2]
              %s636 = sphi %s3, %s3
            $region43: #{conv_block_forward.5} parent=39 // loop_header_branch
              %633 = sbr.rel (%p631) target = $region47
            $region44: #{conv_block_forward.5} parent=39 // loop_body
              %v637 = vld [vmem:[%s635] sm:$0x3]
              %638 = vst [vmem:[%s636] sm:$0x3] %v637
            $region45: #{conv_block_forward.5} parent=39 // loop_footer
              %s634 = sadd.s32 1, %s630
            $region46: #{conv_block_forward.5} parent=39 // loop_footer_branch
              %629 = sbr.rel target = $region42
            $region47: #{conv_block_forward.5} parent=39 // loop_exit
              _
          $region40: #{conv_block_forward.5} parent=24 // pred_fallthru
            _
        $region25: #{conv_block_forward.5} parent=20 // pred_fallthru
          _
        // Predicated region
        $region26: #{conv_block_forward.5} parent=20 // pred_check
          _
        $region27: #{conv_block_forward.5} parent=20 // pred_check_branch
          %614 = sbr.rel (0) target = $region29
        $region28: #{conv_block_forward.5} parent=20 // pred_region
          loop: start=0, step=1, limit=1
          $region30: #{conv_block_forward.5} parent=28 // loop_pre_header
            _
          $region31: #{conv_block_forward.5} parent=28 // loop_header
            %s617 = sphi 0, %s621
            %p618 = scmp.ge.s32.totalorder %s617, 1
            %s622 = sphi [#allocation2], [#allocation2]
            %s623 = sphi %s3, %s3
          $region32: #{conv_block_forward.5} parent=28 // loop_header_branch
            %620 = sbr.rel (%p618) target = $region36
          $region33: #{conv_block_forward.5} parent=28 // loop_body
            %v624 = vld [vmem:[%s622] sm:$0x3]
            %625 = vst [vmem:[%s623] sm:$0x3] %v624
          $region34: #{conv_block_forward.5} parent=28 // loop_footer
            %s621 = sadd.s32 1, %s617
          $region35: #{conv_block_forward.5} parent=28 // loop_footer_branch
            %616 = sbr.rel target = $region31
          $region36: #{conv_block_forward.5} parent=28 // loop_exit
            _
        $region29: #{conv_block_forward.5} parent=20 // pred_fallthru
          _
      $region21: #{conv_block_forward.5} parent=16 // pred_fallthru
        _
      %639 = vnop
    $region17: #{conv_block_forward.5} parent=1 // pred_fallthru
      _
    // Predicated region
    $region48: #{conv_block_forward.5} parent=1 // pred_check
      _
    $region49: #{conv_block_forward.5} parent=1 // pred_check_branch
      %641 = sbr.rel (0) target = $region51
    $region50: #{conv_block_forward.5} parent=1 // pred_region
      _
    $region51: #{conv_block_forward.5} parent=1 // pred_fallthru
      _

</llo_original>
